<compile_context>
chip_gen: v7x
topology: tpu7x:2x2x1
jax: 0.10.0
libtpu: 0.0.40
codegen_flags: <defaults>
</compile_context>

<pallas_src>
import functools

import jax
import jax.numpy as jnp
from jax import lax
from jax.experimental import pallas as pl
from jax.experimental.pallas import tpu as pltpu


def _wce_stats_kernel(x_ref, t_ref, counts_ref, sums_ref, *acc_refs,
                      hw, ragged, single_tile):
    """Per-image per-class counts and sums of -log_softmax(x)[target].

    x_ref:   (1, C, THW) logits block (input dtype; upcast to f32 here)
    t_ref:   (1, 1, THW) int32 target block
    outputs: (1, C, 1) per-image per-class counts / NLL sums
    scratch: optional 2x (C, THW) f32 lane-wide accumulators (multi-tile path)
    """
    t_idx = pl.program_id(1)

    x = x_ref[0].astype(jnp.float32)          # (C, THW)
    tgt = t_ref[0]                            # (1, THW) int32
    c, thw = x.shape

    # One-hot over the class (sublane) axis via an iota compare (no gather).
    class_ids = lax.broadcasted_iota(jnp.int32, (c, thw), 0)
    onehot = class_ids == tgt                 # (C, THW) bool

    if ragged:
        # Mask lanes past the true spatial extent (last partial tile).
        col = t_idx * thw + lax.broadcasted_iota(jnp.int32, (1, thw), 1)
        valid = col < hw                      # (1, THW)
        onehot = jnp.logical_and(onehot, valid)
        x = jnp.where(valid, x, 0.0)          # keep OOB garbage out of exp/log

    onehot_f = onehot.astype(jnp.float32)

    # Numerically stable log-sum-exp over the class (sublane) axis.
    m = jnp.max(x, axis=0, keepdims=True)                                 # (1, THW)
    lse = jnp.log(jnp.sum(jnp.exp(x - m), axis=0, keepdims=True)) + m     # (1, THW)

    # onehot[c, j] * (lse[j] - x[c, j]) == -log p[target_j] scattered to row c.
    nll_rows = onehot_f * (lse - x)

    if single_tile:
        # Whole image in one tile: reduce straight to the tiny outputs —
        # no accumulator zero-init / add traffic at all.
        counts_ref[0] = jnp.sum(onehot_f, axis=-1, keepdims=True)          # (C, 1)
        sums_ref[0] = jnp.sum(nll_rows, axis=-1, keepdims=True)            # (C, 1)
    else:
        cnt_acc, sum_acc = acc_refs

        @pl.when(t_idx == 0)
        def _():
            cnt_acc[...] = jnp.zeros_like(cnt_acc)
            sum_acc[...] = jnp.zeros_like(sum_acc)

        cnt_acc[...] += onehot_f
        sum_acc[...] += nll_rows

        # Epilogue: one cross-lane reduction per image.
        @pl.when(t_idx == pl.num_programs(1) - 1)
        def _():
            counts_ref[0] = jnp.sum(cnt_acc[...], axis=-1, keepdims=True)  # (C, 1)
            sums_ref[0] = jnp.sum(sum_acc[...], axis=-1, keepdims=True)    # (C, 1)


def weighted_cross_entropy_loss(logits, target, n_classes, eps=0.0001,
                                thw=128 * 1024,
                                vmem_budget_bytes=16 * 1024 * 1024):
    """JAX/Pallas equivalent of WeightedCrossEntropyLoss.forward.

    logits: (N, C, *spatial)  (any float dtype; kept as-is in HBM)
    target: (N, 1, *spatial) or (N, *spatial) integer class ids
    """
    del eps  # unused by the PyTorch module's forward as well

    if target.ndim == logits.ndim:
        assert target.shape[1] == 1
        target = target[:, 0]

    N, C = logits.shape[0], logits.shape[1]
    assert C == n_classes

    HW = 1
    for d in logits.shape[2:]:
        HW *= d

    # Free reshapes: no transpose, no dtype change of the big logits tensor.
    x = logits.reshape(N, C, HW)
    t = target.reshape(N, 1, HW).astype(jnp.int32)

    # dtype-aware spatial lane-tile sizing against a VMEM budget.
    itemsize = jnp.dtype(logits.dtype).itemsize
    bytes_per_lane_io = 2 * (C * itemsize + 4)   # double-buffered logits + targets
    bytes_per_lane_acc = 2 * C * 4               # f32 count/sum accumulators

    if HW <= thw and HW * bytes_per_lane_io <= vmem_budget_bytes:
        t_hw, single_tile = HW, True             # one full-width tile per image
    else:
        lane_cap = vmem_budget_bytes // (bytes_per_lane_io + bytes_per_lane_acc)
        t_hw = min(thw, max(128, (lane_cap // 128) * 128))
        single_tile = False
    T = pl.cdiv(HW, t_hw)
    ragged = (HW % t_hw) != 0

    kernel = functools.partial(_wce_stats_kernel, hw=HW, ragged=ragged,
                               single_tile=single_tile)

    scratch_shapes = () if single_tile else (
        pltpu.VMEM((C, t_hw), jnp.float32),
        pltpu.VMEM((C, t_hw), jnp.float32),
    )

    counts_out, sums_out = pl.pallas_call(
        kernel,
        out_shape=(
            jax.ShapeDtypeStruct((N, C, 1), jnp.float32),
            jax.ShapeDtypeStruct((N, C, 1), jnp.float32),
        ),
        grid_spec=pltpu.PrefetchScalarGridSpec(
            num_scalar_prefetch=0,
            grid=(N, T),
            in_specs=[
                pl.BlockSpec((1, C, t_hw), lambda n, s: (n, 0, s)),
                pl.BlockSpec((1, 1, t_hw), lambda n, s: (n, 0, s)),
            ],
            out_specs=[
                pl.BlockSpec((1, C, 1), lambda n, s: (n, 0, 0)),
                pl.BlockSpec((1, C, 1), lambda n, s: (n, 0, 0)),
            ],
            scratch_shapes=scratch_shapes,
        ),
        compiler_params=pltpu.CompilerParams(
            # Batch axis splits across TensorCores (v7x megacore); spatial axis
            # is a sequential reduction into the scratch accumulators.
            dimension_semantics=("parallel", "arbitrary"),
            vmem_limit_bytes=32 * 1024 * 1024),
    )(x, t)

    counts = jnp.sum(counts_out[:, :, 0], axis=0)   # (C,) per-class element counts
    sums = jnp.sum(sums_out[:, :, 0], axis=0)       # (C,) per-class sum of -log p[target]

    # PyTorch: weight = 1 - count/total + 1e-9;
    # loss = sum_i (1/weight[i]) * sum(weight[i] * nll | class i) / count_i.
    # The weight factor cancels exactly, leaving the per-class mean NLL summed.
    # (Classes with zero occurrences give 0/0 = NaN, matching the PyTorch module.)
    return jnp.sum(sums / counts)


def reference_wce(logits, target, n_classes):
    """Pure-JAX reference mirroring the PyTorch forward."""
    if target.ndim == logits.ndim:
        target = target[:, 0]
    counts = jnp.stack(
        [jnp.sum(target == c).astype(jnp.float32) for c in range(n_classes)]
    )
    weight = 1.0 - counts / jnp.sum(counts) + 1e-9
    xt = jnp.moveaxis(logits, 1, -1).astype(jnp.float32)
    logp = jax.nn.log_softmax(xt, axis=-1)
    nll = -jnp.take_along_axis(logp, target[..., None], axis=-1)[..., 0]
    wce_none = weight[target] * nll
    loss = 0.0
    for i in range(n_classes):
        mask = target == i
        loss += (1.0 / weight[i]) * jnp.sum(jnp.where(mask, wce_none, 0.0)) / jnp.sum(mask)
    return loss


if __name__ == "__main__":
    n_classes = 4
    key = jax.random.PRNGKey(0)
    k1, k2, k3, k4 = jax.random.split(key, 4)

    # Case 1: aligned spatial extent, f32 logits (single-tile fast path).
    logits = jax.random.normal(k1, (2, n_classes, 16, 16), dtype=jnp.float32)
    target = jax.random.randint(k2, (2, 1, 16, 16), 0, n_classes, dtype=jnp.int32)
    loss = jax.block_until_ready(weighted_cross_entropy_loss(logits, target, n_classes))
    ref = jax.block_until_ready(reference_wce(logits, target, n_classes))
    assert jnp.allclose(loss, ref, rtol=1e-4, atol=1e-4), (loss, ref)

    # Case 2: ragged spatial extent + bf16 logits + squeezed target, forced
    # multi-tile (exercises the accumulator + lane-masking path).
    logits2 = jax.random.normal(k3, (2, n_classes, 13, 11), dtype=jnp.bfloat16)
    target2 = jax.random.randint(k4, (2, 13, 11), 0, n_classes, dtype=jnp.int32)
    loss2 = jax.block_until_ready(
        weighted_cross_entropy_loss(logits2, target2, n_classes, thw=128))
    ref2 = jax.block_until_ready(reference_wce(logits2, target2, n_classes))
    assert jnp.allclose(loss2, ref2, rtol=2e-3, atol=2e-3), (loss2, ref2)

    print("KERNEL_OK")
</pallas_src>

<mosaic_0001>
module attributes {stable_mosaic.version = 11 : i64} {
  func.func @_wce_stats_kernel(%arg0: i32, %arg1: i32, %arg2: memref<1x4x256xf32, #tpu.memory_space<vmem>>, %arg3: memref<1x1x256xi32, #tpu.memory_space<vmem>>, %arg4: memref<1x4x1xf32, #tpu.memory_space<vmem>>, %arg5: memref<1x4x1xf32, #tpu.memory_space<vmem>>) attributes {dimension_semantics = [#tpu.dimension_semantics<parallel>, #tpu.dimension_semantics<arbitrary>], iteration_bounds = array<i64: 2, 1>, scalar_prefetch = 0 : i64, scratch_operands = 0 : i64, tpu.core_type = #tpu.core_type<tc>, window_params = [{transform_indices = @transform_0, window_bounds = array<i64: 1, 4, 256>}, {transform_indices = @transform_1, window_bounds = array<i64: 1, 1, 256>}, {transform_indices = @transform_2, window_bounds = array<i64: 1, 4, 1>}, {transform_indices = @transform_3, window_bounds = array<i64: 1, 4, 1>}]} {
    %c0 = arith.constant 0 : index
    %c0_0 = arith.constant 0 : index
    %c0_1 = arith.constant 0 : index
    %0 = vector.load %arg2[%c0, %c0_0, %c0_1] : memref<1x4x256xf32, #tpu.memory_space<vmem>>, vector<1x4x256xf32>
    %1 = vector.shape_cast %0 : vector<1x4x256xf32> to vector<4x256xf32>
    %c0_2 = arith.constant 0 : index
    %c0_3 = arith.constant 0 : index
    %c0_4 = arith.constant 0 : index
    %2 = vector.load %arg3[%c0_2, %c0_3, %c0_4] : memref<1x1x256xi32, #tpu.memory_space<vmem>>, vector<1x1x256xi32>
    %3 = vector.shape_cast %2 : vector<1x1x256xi32> to vector<1x256xi32>
    %4 = tpu.iota {dimensions = array<i32: 0>} : vector<4x256xi32>
    %5 = vector.broadcast %3 : vector<1x256xi32> to vector<4x256xi32>
    %6 = arith.cmpi eq, %4, %5 : vector<4x256xi32>
    %7 = arith.extui %6 : vector<4x256xi1> to vector<4x256xi32>
    %8 = arith.sitofp %7 : vector<4x256xi32> to vector<4x256xf32>
    %cst = arith.constant dense<0xFF800000> : vector<256xf32>
    %9 = vector.multi_reduction <maximumf>, %1, %cst [0] : vector<4x256xf32> to vector<256xf32>
    %10 = vector.shape_cast %9 : vector<256xf32> to vector<1x256xf32>
    %11 = vector.broadcast %10 : vector<1x256xf32> to vector<4x256xf32>
    %12 = arith.subf %1, %11 : vector<4x256xf32>
    %13 = math.exp %12 : vector<4x256xf32>
    %cst_5 = arith.constant dense<0.000000e+00> : vector<256xf32>
    %14 = vector.multi_reduction <add>, %13, %cst_5 [0] : vector<4x256xf32> to vector<256xf32>
    %15 = vector.shape_cast %14 : vector<256xf32> to vector<1x256xf32>
    %16 = math.log %15 : vector<1x256xf32>
    %17 = arith.addf %16, %10 : vector<1x256xf32>
    %18 = vector.broadcast %17 : vector<1x256xf32> to vector<4x256xf32>
    %19 = arith.subf %18, %1 : vector<4x256xf32>
    %20 = arith.mulf %8, %19 : vector<4x256xf32>
    %cst_6 = arith.constant dense<0.000000e+00> : vector<4xf32>
    %21 = vector.multi_reduction <add>, %8, %cst_6 [1] : vector<4x256xf32> to vector<4xf32>
    %22 = vector.shape_cast %21 : vector<4xf32> to vector<4x1xf32>
    %c0_7 = arith.constant 0 : index
    %c0_8 = arith.constant 0 : index
    %c0_9 = arith.constant 0 : index
    %23 = vector.load %arg4[%c0_7, %c0_8, %c0_9] : memref<1x4x1xf32, #tpu.memory_space<vmem>>, vector<1x4x1xf32>
    %24 = vector.shape_cast %23 : vector<1x4x1xf32> to vector<4x1xf32>
    %25 = vector.shape_cast %22 : vector<4x1xf32> to vector<1x4x1xf32>
    tpu.vector_store %arg4[%c0_7, %c0_8, %c0_9], %25 {strides = array<i32>} : memref<1x4x1xf32, #tpu.memory_space<vmem>>, vector<1x4x1xf32>,
    %cst_10 = arith.constant dense<0.000000e+00> : vector<4xf32>
    %26 = vector.multi_reduction <add>, %20, %cst_10 [1] : vector<4x256xf32> to vector<4xf32>
    %27 = vector.shape_cast %26 : vector<4xf32> to vector<4x1xf32>
    %c0_11 = arith.constant 0 : index
    %c0_12 = arith.constant 0 : index
    %c0_13 = arith.constant 0 : index
    %28 = vector.load %arg5[%c0_11, %c0_12, %c0_13] : memref<1x4x1xf32, #tpu.memory_space<vmem>>, vector<1x4x1xf32>
    %29 = vector.shape_cast %28 : vector<1x4x1xf32> to vector<4x1xf32>
    %30 = vector.shape_cast %27 : vector<4x1xf32> to vector<1x4x1xf32>
    tpu.vector_store %arg5[%c0_11, %c0_12, %c0_13], %30 {strides = array<i32>} : memref<1x4x1xf32, #tpu.memory_space<vmem>>, vector<1x4x1xf32>,
    return
  }
  func.func @transform_0(%arg0: i32, %arg1: i32) -> (i32, i32, i32) {
    %c0_i32 = arith.constant 0 : i32
    %c0_i32_0 = arith.constant 0 : i32
    return %arg0, %c0_i32, %arg1 : i32, i32, i32
  }
  func.func @transform_1(%arg0: i32, %arg1: i32) -> (i32, i32, i32) {
    %c0_i32 = arith.constant 0 : i32
    %c0_i32_0 = arith.constant 0 : i32
    return %arg0, %c0_i32, %arg1 : i32, i32, i32
  }
  func.func @transform_2(%arg0: i32, %arg1: i32) -> (i32, i32, i32) {
    %c0_i32 = arith.constant 0 : i32
    %c0_i32_0 = arith.constant 0 : i32
    %c0_i32_1 = arith.constant 0 : i32
    return %arg0, %c0_i32, %c0_i32_0 : i32, i32, i32
  }
  func.func @transform_3(%arg0: i32, %arg1: i32) -> (i32, i32, i32) {
    %c0_i32 = arith.constant 0 : i32
    %c0_i32_0 = arith.constant 0 : i32
    %c0_i32_1 = arith.constant 0 : i32
    return %arg0, %c0_i32, %c0_i32_0 : i32, i32, i32
  }
}

</mosaic_0001>

<llo_original>
// kernel: tpu_custom_call.1
$region0: #{tpu_custom_call.1}
  #allocation0 [shape = 'u32[]', space=smem, size = 0x4, offset = 0x4, fixed_abs, tag = 'smem constant byte address 0x4 - core index']
  #allocation1 [shape = 'u32[144,128]{1,0:T(1,128)}', space=vmem, size = 0x12000, scoped, tag = 'internal scratch']
  %s0 = inlined_call_operand.hbm [shape: f32[2,4,256], index: 0, kind: input, shape index: {}]
  %s1 = inlined_call_operand.hbm [shape: s32[2,1,256], index: 1, kind: input, shape index: {}]
  %s2 = inlined_call_operand.vmem [shape: f32[2,4,1], index: 2, kind: output, shape index: {0}]
  %s3 = inlined_call_operand.vmem [shape: f32[2,4,1], index: 3, kind: output, shape index: {1}]
  %4 = xla_tuple %s2, %s3
  %s5 = sld [smem:[#allocation0]]
  $region57: #{tpu_custom_call.1} parent=0
    _
  %s7 = ssub.s32 1, %s5
  %s8 = scalar_select 0, %s7, %s5
  $region1: #{tpu_custom_call.1} parent=0
    #allocation2 [shape = 'u8[8192]{0}', space=vmem, size = 0x2000, scoped, tag = 'input window, operand 0']
    #allocation3 [shape = 's32[2]{0}', space=sflag, size = 0x8, scoped, tag = 'scoped memory for tpu_custom_call.1']
    #allocation4 [shape = 'u8[2048]{0}', space=vmem, size = 0x800, scoped, tag = 'input window, operand 1']
    #allocation5 [shape = 's32[2]{0}', space=sflag, size = 0x8, scoped, tag = 'scoped memory for tpu_custom_call.1']
    %9 = vsyncpa [#allocation3], 0
    %s10 = scalar_lea.sflag [#allocation3], 1
    %11 = vsyncpa %s10, 0
    %12 = vsyncpa [#allocation5], 0
    %s13 = scalar_lea.sflag [#allocation5], 1
    %14 = vsyncpa %s13, 0
    loop: start=0, step=1, limit=4
    $region2: #{tpu_custom_call.1} parent=1 // loop_pre_header
      _
    $region3: #{tpu_custom_call.1} parent=1 // loop_header
      %s16 = sphi 0, %s20
      %p17 = scmp.ge.s32.totalorder %s16, 4
      %s23 = sphi 0, %s35
      %s24 = sphi 0, %s31
      %s25 = sphi 0, %s23
      %s26 = sphi 0, %s24
      %s27 = sphi 0, %s25
      %s28 = sphi 0, %s26
      %s40 = sphi 0, %s42
      %s43 = sphi 0, %s40
      %s44 = sphi 0, %s43
      %s60 = sphi 0, %s44
      %s68 = sphi 0, %s70
      %s71 = sphi 0, %s68
      %s72 = sphi 0, %s71
      %s88 = sphi 0, %s72
      %s94 = sphi 0, %s96
      %s97 = sphi 0, %s94
      %s98 = sphi 0, %s97
      %s114 = sphi 0, %s98
      %s120 = sphi 0, %s122
      %s123 = sphi 0, %s120
      %s124 = sphi 0, %s123
      %s140 = sphi 0, %s124
    $region4: #{tpu_custom_call.1} parent=1 // loop_header_branch
      %19 = sbr.rel (%p17) target = $region8
    $region5: #{tpu_custom_call.1} parent=1 // loop_body
      %s21 = ssub.s32 %s16, 1
      %s22 = ssub.s32 %s16, 2
      %s29 = sadd.s32 1, %s24
      %p30 = scmp.ge.s32.totalorder %s29, 1
      %s31 = scalar_select %p30, 0, %s29
      %s32 = sadd.s32 1, %s23
      %s33 = scalar_select %p30, %s32, %s23
      %p34 = scmp.ge.s32.totalorder %s33, 2
      %s35 = scalar_select %p34, 0, %s33
      %s36 = ssub.s32 %s23, %s35
      %s37 = ssub.s32 %s24, %s31
      %s38 = sor.u32 %s36, %s37
      %p39 = scmp.eq.s32.totalorder %s38, 0
      %s41 = sadd.s32 %s40, 1
      %s42 = scalar_select %p39, %s40, %s41
      %p45 = pneg %p39
      %p46 = scmp.eq.s32.totalorder %s16, 1
      %p47 = por %p45, %p46
      %p48 = scmp.ne.s32.totalorder %s40, %s43
      %p49 = scmp.eq.s32.totalorder %s16, 0
      %p50 = por %p48, %p49
      %p51 = scmp.ne.s32.totalorder %s40, %s43
      %p52 = scmp.eq.s32.totalorder %s21, 1
      %p53 = por %p51, %p52
      %p54 = scmp.ne.s32.totalorder %s43, %s44
      %p55 = scmp.eq.s32.totalorder %s21, 0
      %p56 = por %p54, %p55
      %p57 = scmp.ne.s32.totalorder %s43, %s44
      %p58 = scmp.eq.s32.totalorder %s22, 1
      %p59 = por %p57, %p58
      %p61 = scmp.ne.s32.totalorder %s44, %s60
      %p62 = scmp.eq.s32.totalorder %s22, 0
      %p63 = por %p61, %p62
      %s64 = ssub.s32 %s23, %s35
      %s65 = ssub.s32 %s24, %s31
      %s66 = sor.u32 %s64, %s65
      %p67 = scmp.eq.s32.totalorder %s66, 0
      %s69 = sadd.s32 %s68, 1
      %s70 = scalar_select %p67, %s68, %s69
      %p73 = pneg %p67
      %p74 = scmp.eq.s32.totalorder %s16, 1
      %p75 = por %p73, %p74
      %p76 = scmp.ne.s32.totalorder %s68, %s71
      %p77 = scmp.eq.s32.totalorder %s16, 0
      %p78 = por %p76, %p77
      %p79 = scmp.ne.s32.totalorder %s68, %s71
      %p80 = scmp.eq.s32.totalorder %s21, 1
      %p81 = por %p79, %p80
      %p82 = scmp.ne.s32.totalorder %s71, %s72
      %p83 = scmp.eq.s32.totalorder %s21, 0
      %p84 = por %p82, %p83
      %p85 = scmp.ne.s32.totalorder %s71, %s72
      %p86 = scmp.eq.s32.totalorder %s22, 1
      %p87 = por %p85, %p86
      %p89 = scmp.ne.s32.totalorder %s72, %s88
      %p90 = scmp.eq.s32.totalorder %s22, 0
      %p91 = por %p89, %p90
      %s92 = ssub.s32 %s23, %s35
      %p93 = scmp.eq.s32.totalorder %s92, 0
      %s95 = sadd.s32 %s94, 1
      %s96 = scalar_select %p93, %s94, %s95
      %p99 = pneg %p93
      %p100 = scmp.eq.s32.totalorder %s16, 1
      %p101 = por %p99, %p100
      %p102 = scmp.ne.s32.totalorder %s94, %s97
      %p103 = scmp.eq.s32.totalorder %s16, 0
      %p104 = por %p102, %p103
      %p105 = scmp.ne.s32.totalorder %s94, %s97
      %p106 = scmp.eq.s32.totalorder %s21, 1
      %p107 = por %p105, %p106
      %p108 = scmp.ne.s32.totalorder %s97, %s98
      %p109 = scmp.eq.s32.totalorder %s21, 0
      %p110 = por %p108, %p109
      %p111 = scmp.ne.s32.totalorder %s97, %s98
      %p112 = scmp.eq.s32.totalorder %s22, 1
      %p113 = por %p111, %p112
      %p115 = scmp.ne.s32.totalorder %s98, %s114
      %p116 = scmp.eq.s32.totalorder %s22, 0
      %p117 = por %p115, %p116
      %s118 = ssub.s32 %s23, %s35
      %p119 = scmp.eq.s32.totalorder %s118, 0
      %s121 = sadd.s32 %s120, 1
      %s122 = scalar_select %p119, %s120, %s121
      %p125 = pneg %p119
      %p126 = scmp.eq.s32.totalorder %s16, 1
      %p127 = por %p125, %p126
      %p128 = scmp.ne.s32.totalorder %s120, %s123
      %p129 = scmp.eq.s32.totalorder %s16, 0
      %p130 = por %p128, %p129
      %p131 = scmp.ne.s32.totalorder %s120, %s123
      %p132 = scmp.eq.s32.totalorder %s21, 1
      %p133 = por %p131, %p132
      %p134 = scmp.ne.s32.totalorder %s123, %s124
      %p135 = scmp.eq.s32.totalorder %s21, 0
      %p136 = por %p134, %p135
      %p137 = scmp.ne.s32.totalorder %s123, %s124
      %p138 = scmp.eq.s32.totalorder %s22, 1
      %p139 = por %p137, %p138
      %p141 = scmp.ne.s32.totalorder %s124, %s140
      %p142 = scmp.eq.s32.totalorder %s22, 0
      %p143 = por %p141, %p142
      %p144 = scmp.le.s32.totalorder 1, %s16
      %p145 = scmp.lt.s32.totalorder %s16, 3
      %p146 = pnand %p144, %p145
      %p147 = pneg %p146
      // Predicated region
      $region9: #{tpu_custom_call.1} parent=5 // pred_check
        _
      $region10: #{tpu_custom_call.1} parent=5 // pred_check_branch
        %149 = sbr.rel (%p146) target = $region12
      $region11: #{tpu_custom_call.1} parent=5 // pred_region
        %s150 = ssub.s32 %s16, 1
      $region12: #{tpu_custom_call.1} parent=5 // pred_fallthru
        _
      %p151 = scmp.lt.s32.totalorder %s16, 2
      // Predicated region
      $region13: #{tpu_custom_call.1} parent=5 // pred_check
        %p152 = pneg %p151
      $region14: #{tpu_custom_call.1} parent=5 // pred_check_branch
        %154 = sbr.rel (%p152) target = $region16
      $region15: #{tpu_custom_call.1} parent=5 // pred_region
        // Predicated region
        $region17: #{tpu_custom_call.1} parent=15 // pred_check
          %p155 = pneg %p50
        $region18: #{tpu_custom_call.1} parent=15 // pred_check_branch
          %157 = sbr.rel (%p155) target = $region20
        $region19: #{tpu_custom_call.1} parent=15 // pred_region
          %s158 = sand.u32 %s40, 1
          %s159 = scalar_lea.sflag [#allocation3], %s158
          %s160 = sand.u32 %s40, 1
          %s161 = smul.addr %s160, 8
          %s162 = scalar_lea.vmem [#allocation2], %s161
          %s163 = smul.u32 2, %s24
          %s165 = ssub.s32 128, 128
          %166 = vsyncadd %s159, %s165
          %s167 = smul.addr %s23, 2
          %s168 = sadd.s32 %s163, %s167
          %s169 = smul.addr %s168, 64
          %s170 = scalar_lea.hbm %s0, %s169
          %s172 = sshll.u32 %s162, 4
          %s173 = int_to_ptr.vmem [resolvable:$true] %s172
          %175 = dma.hbm_to_vmem [thread:$0]  %s170, 128, %s173, %s159
        $region20: #{tpu_custom_call.1} parent=15 // pred_fallthru
          _
        // Predicated region
        $region21: #{tpu_custom_call.1} parent=15 // pred_check
          %p176 = pneg %p78
        $region22: #{tpu_custom_call.1} parent=15 // pred_check_branch
          %178 = sbr.rel (%p176) target = $region24
        $region23: #{tpu_custom_call.1} parent=15 // pred_region
          %s179 = sand.u32 %s68, 1
          %s180 = scalar_lea.sflag [#allocation5], %s179
          %s181 = sand.u32 %s68, 1
          %s182 = smul.addr %s181, 2
          %s183 = scalar_lea.vmem [#allocation4], %s182
          %s184 = smul.u32 2, %s24
          %s186 = ssub.s32 32, 32
          %187 = vsyncadd %s180, %s186
          %s188 = smul.addr %s23, 2
          %s189 = sadd.s32 %s184, %s188
          %s190 = smul.addr %s189, 16
          %s191 = scalar_lea.hbm %s1, %s190
          %s193 = sshll.u32 %s183, 4
          %s194 = int_to_ptr.vmem [resolvable:$true] %s193
          %196 = dma.hbm_to_vmem [thread:$0]  %s191, 32, %s194, %s180
        $region24: #{tpu_custom_call.1} parent=15 // pred_fallthru
          _
      $region16: #{tpu_custom_call.1} parent=5 // pred_fallthru
        _
      %p197 = scmp.le.s32.totalorder 1, %s16
      %p198 = scmp.lt.s32.totalorder %s16, 3
      %p199 = pnand %p197, %p198
      %p200 = pneg %p199
      // Predicated region
      $region25: #{tpu_custom_call.1} parent=5 // pred_check
        _
      $region26: #{tpu_custom_call.1} parent=5 // pred_check_branch
        %202 = sbr.rel (%p199) target = $region28
      $region27: #{tpu_custom_call.1} parent=5 // pred_region
        %s203 = ssub.s32 %s16, 1
        %s204 = sand.u32 %s43, 1
        %s205 = scalar_lea.sflag [#allocation3], %s204
        %s206 = sand.u32 %s43, 1
        %s207 = smul.addr %s206, 8
        %s208 = scalar_lea.vmem [#allocation2], %s207
        // Predicated region
        $region29: #{tpu_custom_call.1} parent=27 // pred_check
          %p209 = pneg %p56
        $region30: #{tpu_custom_call.1} parent=27 // pred_check_branch
          %211 = sbr.rel (%p209) target = $region32
        $region31: #{tpu_custom_call.1} parent=27 // pred_region
          %212 = dma.done %s205, 128
        $region32: #{tpu_custom_call.1} parent=27 // pred_fallthru
          _
        %s213 = sand.u32 %s71, 1
        %s214 = scalar_lea.sflag [#allocation5], %s213
        %s215 = sand.u32 %s71, 1
        %s216 = smul.addr %s215, 2
        %s217 = scalar_lea.vmem [#allocation4], %s216
        // Predicated region
        $region33: #{tpu_custom_call.1} parent=27 // pred_check
          %p218 = pneg %p84
        $region34: #{tpu_custom_call.1} parent=27 // pred_check_branch
          %220 = sbr.rel (%p218) target = $region36
        $region35: #{tpu_custom_call.1} parent=27 // pred_region
          %221 = dma.done %s214, 32
        $region36: #{tpu_custom_call.1} parent=27 // pred_fallthru
          _
        %s222 = sand.u32 %s43, 1
        %s223 = scalar_lea.sflag [#allocation3], %s222
        %s224 = sand.u32 %s43, 1
        %s225 = smul.addr %s224, 8
        %s226 = scalar_lea.vmem [#allocation2], %s225
        %p227 = pneg %p56
        %p228 = pneg %p53
        %s229 = sand.u32 %s71, 1
        %s230 = scalar_lea.sflag [#allocation5], %s229
        %s231 = sand.u32 %s71, 1
        %s232 = smul.addr %s231, 2
        %s233 = scalar_lea.vmem [#allocation4], %s232
        %p234 = pneg %p84
        %p235 = pneg %p81
        %p236 = pneg %p110
        %p237 = pneg %p107
        %p238 = scmp.lt.s32.totalorder %s25, 1
        %s239 = scalar_select %p238, %s25, 1
        %s240 = smul.addr %s239, 4
        %s241 = scalar_lea.vmem %s2, %s240
        %p242 = pneg %p136
        %p243 = pneg %p133
        %p244 = scmp.lt.s32.totalorder %s25, 1
        %s245 = scalar_select %p244, %s25, 1
        %s246 = smul.addr %s245, 4
        %s247 = scalar_lea.vmem %s3, %s246
        %s248 = smul.u32 2, %s26
        %s249 = smul.u32 2, %s26
        %p250 = scmp.lt.s32.totalorder %s25, 1
        %s251 = scalar_select %p250, %s25, 1
        %s252 = smul.addr %s251, 4
        %s253 = scalar_lea.vmem %s2, %s252
        %p254 = scmp.lt.s32.totalorder %s25, 1
        %s255 = scalar_select %p254, %s25, 1
        %s256 = smul.addr %s255, 4
        %s257 = scalar_lea.vmem %s3, %s256
        %v258 = vld [vmem:[%s208] sm:$0xff]
        %v259 = vld [vmem:[%s217] sm:$0x3]
        %v260 = vlaneseq
        %v261 = vshrl.u32 %v260, 7
        %v262 = vlaneseq
        %v263 = vshrl.u32 %v262, 7
        %v264 = vsub.s32 0, %v263
        %v265 = vrot.slane %v259, %v264
        %v266 = vlaneseq
        %v267 = vshrl.u32 %v266, 7
        %v268 = vsub.s32 1, %v267
        %v269 = vrot.slane %v259, %v268
        %vm270 = vcmp.eq.s32.totalorder %v261, %v265
        %vm271 = vcmp.eq.s32.totalorder %v261, %v269
        %v272 = vsel %vm270, 1, 0
        %v273 = vsel %vm271, 1, 0
        %v274 = vcvt.s32.f32 %v272
        %v275 = vcvt.s32.f32 %v273
        %v277 = vcombine.high %v258, %v258
        %vm279 = vcmask 1043456
        %v280 = vsel %vm279, %v258, -inf
        %v281 = vrot.slane %v280, 4
        %v282 = vmax.f32 %v280, %v281
        %v283 = vrot.slane %v282, 2
        %v284 = vmax.f32 %v282, %v283
        %v285 = vrot.slane %v284, 1
        %v286 = vmax.f32 %v284, %v285
        %v287 = vsel %vm279, %v277, -inf
        %v288 = vrot.slane %v287, 4
        %v289 = vmax.f32 %v287, %v288
        %v290 = vrot.slane %v289, 2
        %v291 = vmax.f32 %v289, %v290
        %v292 = vrot.slane %v291, 1
        %v293 = vmax.f32 %v291, %v292
        %v296 = vcombine.low %v286, %v293
        %v298 = vsub.f32 %v258, %v296
        %v299 = vmul.f32 %v298, 1.442695
        %v300 = vpow.pop %v299
        %v302 = vcombine.high %v300, %v300
        %v304 = vsel %vm279, %v300, 0.0
        %v305 = vrot.slane %v304, 4
        %v306 = vadd.f32 %v304, %v305
        %v307 = vrot.slane %v306, 2
        %v308 = vadd.f32 %v306, %v307
        %v309 = vrot.slane %v308, 1
        %v310 = vadd.f32 %v308, %v309
        %v311 = vsel %vm279, %v302, 0.0
        %v312 = vrot.slane %v311, 4
        %v313 = vadd.f32 %v311, %v312
        %v314 = vrot.slane %v313, 2
        %v315 = vadd.f32 %v313, %v314
        %v316 = vrot.slane %v315, 1
        %v317 = vadd.f32 %v315, %v316
        %v318 = vlog2.pop %v310
        %v319 = vmul.f32 %v318, 0.6931472
        %v320 = vlog2.pop %v317
        %v321 = vmul.f32 %v320, 0.6931472
        %v322 = vadd.f32 %v319, %v286
        %v323 = vadd.f32 %v321, %v293
        %v324 = vsub.f32 %v322, %v258
        %v325 = vsub.f32 %v323, %v277
        %v326 = vmul.f32 %v274, %v324
        %v327 = vmul.f32 %v275, %v325
        %v328 = vsel %vm279, %v274, 0.0
        %v329 = vsel %vm279, %v275, 0.0
        %v330 = vadd.f32 %v328, %v329
        %331 = vadd.xlane.f32.xlu0 %v330
        %v332 = vpop.xlane.xlu0 %331
        %vm333 = vcmask 3072
        %334 = vst.msk [vmem:[%s253] sm:$0xf] %vm333, %v332
        %v335 = vsel %vm279, %v326, 0.0
        %v336 = vsel %vm279, %v327, 0.0
        %v337 = vadd.f32 %v335, %v336
        %338 = vadd.xlane.f32.xlu0 %v337
        %v339 = vpop.xlane.xlu0 %338
        %340 = vst.msk [vmem:[%s257] sm:$0xf] %vm333, %v339
        %p341 = scmp.lt.s32.totalorder %s25, 1
        %s342 = scalar_select %p341, %s25, 1
        %s343 = smul.addr %s342, 4
        %s344 = scalar_lea.vmem %s2, %s343
        %p345 = scmp.lt.s32.totalorder %s25, 1
        %s346 = scalar_select %p345, %s25, 1
        %s347 = smul.addr %s346, 4
        %s348 = scalar_lea.vmem %s3, %s347
        // Predicated region
        $region37: #{tpu_custom_call.1} parent=27 // pred_check
          %p349 = pneg %p107
        $region38: #{tpu_custom_call.1} parent=27 // pred_check_branch
          %351 = sbr.rel (%p349) target = $region40
        $region39: #{tpu_custom_call.1} parent=27 // pred_region
          _
        $region40: #{tpu_custom_call.1} parent=27 // pred_fallthru
          _
        // Predicated region
        $region41: #{tpu_custom_call.1} parent=27 // pred_check
          %p352 = pneg %p133
        $region42: #{tpu_custom_call.1} parent=27 // pred_check_branch
          %354 = sbr.rel (%p352) target = $region44
        $region43: #{tpu_custom_call.1} parent=27 // pred_region
          _
        $region44: #{tpu_custom_call.1} parent=27 // pred_fallthru
          _
      $region28: #{tpu_custom_call.1} parent=5 // pred_fallthru
        _
      %p355 = scmp.le.s32.totalorder 2, %s16
      // Predicated region
      $region45: #{tpu_custom_call.1} parent=5 // pred_check
        %p356 = pneg %p355
      $region46: #{tpu_custom_call.1} parent=5 // pred_check_branch
        %358 = sbr.rel (%p356) target = $region48
      $region47: #{tpu_custom_call.1} parent=5 // pred_region
        %s359 = ssub.s32 %s16, 2
        // Predicated region
        $region49: #{tpu_custom_call.1} parent=47 // pred_check
          %p360 = pneg %p113
        $region50: #{tpu_custom_call.1} parent=47 // pred_check_branch
          %362 = sbr.rel (%p360) target = $region52
        $region51: #{tpu_custom_call.1} parent=47 // pred_region
          %p363 = scmp.lt.s32.totalorder %s27, 1
          %s364 = scalar_select %p363, %s27, 1
          %s365 = smul.addr %s364, 4
          %s366 = scalar_lea.vmem %s2, %s365
        $region52: #{tpu_custom_call.1} parent=47 // pred_fallthru
          _
        // Predicated region
        $region53: #{tpu_custom_call.1} parent=47 // pred_check
          %p367 = pneg %p139
        $region54: #{tpu_custom_call.1} parent=47 // pred_check_branch
          %369 = sbr.rel (%p367) target = $region56
        $region55: #{tpu_custom_call.1} parent=47 // pred_region
          %p370 = scmp.lt.s32.totalorder %s27, 1
          %s371 = scalar_select %p370, %s27, 1
          %s372 = smul.addr %s371, 4
          %s373 = scalar_lea.vmem %s3, %s372
        $region56: #{tpu_custom_call.1} parent=47 // pred_fallthru
          _
      $region48: #{tpu_custom_call.1} parent=5 // pred_fallthru
        _
    $region6: #{tpu_custom_call.1} parent=1 // loop_footer
      %s20 = sadd.s32 1, %s16
    $region7: #{tpu_custom_call.1} parent=1 // loop_footer_branch
      %15 = sbr.rel target = $region3
    $region8: #{tpu_custom_call.1} parent=1 // loop_exit
      _
    %374 = vsyncpa [#allocation3], 1
    %s375 = scalar_lea.sflag [#allocation3], 1
    %376 = vsyncpa %s375, 1
    %377 = vsyncpa [#allocation5], 1
    %s378 = scalar_lea.sflag [#allocation5], 1
    %379 = vsyncpa %s378, 1

</llo_original>
